<compile_context>
chip_gen: v7x
topology: tpu7x:2x2x1
jax: 0.10.0
libtpu: 0.0.40
codegen_flags: <defaults>
</compile_context>

<pallas_src>
import functools

import jax
import jax.numpy as jnp
from jax import lax
from jax.experimental import pallas as pl
from jax.experimental.pallas import tpu as pltpu


_VMEM = pl.BlockSpec(memory_space=pltpu.MemorySpace.VMEM)
_SMEM = pl.BlockSpec(memory_space=pltpu.MemorySpace.SMEM)
_LANE = 128      # lane granule
_SUBLANE = 8     # f32 sublane granule
_VMEM_LIMIT = 32 * 1024 * 1024


def _round_up(x, m):
    return ((x + m - 1) // m) * m


# ---------------------------------------------------------------------------
# Kernel A: one-time, batch-invariant precompute.
#   Gf     = relu(adj @ (node_embd @ Wg + bg)).T @ Wf_pad     (hidden, N_pad)
#   W_comb = Wm @ Gf                                          (seq_dim, N_pad)
#   b_comb = bm @ Gf + bf_pad                                  (1, N_pad)
# ---------------------------------------------------------------------------
def _precompute_kernel(node_embd_ref, adj_ref, wg_ref, bg_ref, wf_ref, bf_ref,
                       wm_ref, bm_ref, wcomb_ref, bcomb_ref):
    # GCN layer: relu(adj @ (node_embd @ Wg + bg)).
    h = jnp.dot(node_embd_ref[...], wg_ref[...],
                preferred_element_type=jnp.float32) + bg_ref[...]
    graph_out = jnp.maximum(
        jnp.dot(adj_ref[...], h, preferred_element_type=jnp.float32), 0.0)
    # graph_out.T @ Wf without materializing the transpose (contract dim 0 / 0).
    # Wf arrives lane-padded, so Gf (and everything downstream) is born padded.
    gf = lax.dot_general(graph_out, wf_ref[...],
                         dimension_numbers=(((0,), (0,)), ((), ())),
                         preferred_element_type=jnp.float32)    # (hidden, N_pad)
    # Fold the seq MLP into the graph/FC branch:
    #   (emb @ Wm + bm) @ Gf + bf  ==  emb @ (Wm @ Gf) + (bm @ Gf + bf)
    wcomb = jnp.dot(wm_ref[...], gf, preferred_element_type=jnp.float32)
    bcomb = jnp.dot(bm_ref[...], gf, preferred_element_type=jnp.float32) + bf_ref[...]
    wcomb_ref[...] = wcomb.astype(wcomb_ref.dtype)   # stored bf16: per-call stream
    bcomb_ref[...] = bcomb                           # bias stays f32


@jax.jit
def precompute_folded_weights(node_embd, adj, wg, bg, wf, bf, wm, bm):
    """One-time precompute. Emits W_comb (bf16) / b_comb (f32) already padded."""
    seq_dim = wm.shape[0]
    num_nodes = adj.shape[0]
    n_pad = _round_up(num_nodes, _LANE)
    # Padding of the graph-side weights happens ONCE here, never per forward.
    wf_p = jnp.pad(wf, ((0, 0), (0, n_pad - num_nodes)))
    bf_p = jnp.pad(bf, ((0, 0), (0, n_pad - num_nodes)))
    return pl.pallas_call(
        _precompute_kernel,
        out_shape=(
            jax.ShapeDtypeStruct((seq_dim, n_pad), jnp.bfloat16),  # W_comb
            jax.ShapeDtypeStruct((1, n_pad), jnp.float32),         # b_comb
        ),
        in_specs=[_VMEM] * 8,
        out_specs=(_VMEM, _VMEM),
        compiler_params=pltpu.CompilerParams(vmem_limit_bytes=_VMEM_LIMIT),
    )(node_embd, adj, wg, bg, wf_p, bf_p, wm, bm)


# ---------------------------------------------------------------------------
# Kernel B: per-forward path.  logits = emb @ W_comb + b_comb  (+ BCE mean loss)
# ---------------------------------------------------------------------------
def _forward_kernel(emb_ref, labels_ref, wcomb_ref, bcomb_ref,
                    logits_ref, loss_ref, *, b_actual, n_actual):
    # Single GEMM; MXU operands bf16, accumulate / elementwise f32.
    emb = emb_ref[...].astype(jnp.bfloat16)      # in-kernel cast: free VPU filler
    logits = jnp.dot(emb, wcomb_ref[...],
                     preferred_element_type=jnp.float32) + bcomb_ref[...]
    logits_ref[...] = logits                      # lane-dense store (N_pad % 128 == 0)

    # BCEWithLogitsLoss (mean over the REAL b x n elements), stable form:
    #   max(x, 0) - x*y + log1p(exp(-|x|))
    y = labels_ref[...].astype(jnp.float32)       # labels stream narrow, upcast here
    per_elem = (jnp.maximum(logits, 0.0) - logits * y
                + jnp.log1p(jnp.exp(-jnp.abs(logits))))

    bp, npad = per_elem.shape
    if bp > b_actual:    # static trace-time guard: skip iota/mask if aligned
        rows = lax.broadcasted_iota(jnp.int32, (bp, npad), 0)
        per_elem = jnp.where(rows < b_actual, per_elem, 0.0)
    if npad > n_actual:
        cols = lax.broadcasted_iota(jnp.int32, (bp, npad), 1)
        per_elem = jnp.where(cols < n_actual, per_elem, 0.0)

    inv_count = jnp.float32(1.0 / float(b_actual * n_actual))   # no VPU divide
    loss_ref[0] = jnp.sum(per_elem) * inv_count                 # scalar -> SMEM


@functools.partial(jax.jit, static_argnames="num_labels")
def protgcn_forward(embeddings, labels, w_comb, b_comb, num_labels):
    b = embeddings.shape[0]
    n_pad = w_comb.shape[1]
    b_pad = _round_up(b, _SUBLANE)

    emb_p = jnp.pad(embeddings, ((0, b_pad - b), (0, 0)))
    lab_p = jnp.pad(labels.astype(jnp.bfloat16),
                    ((0, b_pad - b), (0, n_pad - num_labels)))

    kernel = functools.partial(_forward_kernel, b_actual=b, n_actual=num_labels)
    logits_p, loss = pl.pallas_call(
        kernel,
        out_shape=(
            jax.ShapeDtypeStruct((b_pad, n_pad), jnp.float32),  # padded logits
            jax.ShapeDtypeStruct((1,), jnp.float32),            # scalar loss
        ),
        in_specs=[_VMEM] * 4,
        out_specs=(_VMEM, _SMEM),
        compiler_params=pltpu.CompilerParams(vmem_limit_bytes=_VMEM_LIMIT),
    )(emb_p, lab_p, w_comb, b_comb)
    return loss[0], logits_p[:b, :num_labels]


# ---------------------------------------------------------------------------
# Parameter / input construction (deterministic).
# ---------------------------------------------------------------------------
def init_params(key, seq_dim, node_feats, hidden_dim, num_nodes):
    ks = jax.random.split(key, 4)

    def lin(k, fan_in, fan_out):
        kw, kb = jax.random.split(k)
        bound = 1.0 / jnp.sqrt(jnp.float32(fan_in))
        w = jax.random.uniform(kw, (fan_in, fan_out), jnp.float32, -bound, bound)
        b = jax.random.uniform(kb, (1, fan_out), jnp.float32, -bound, bound)
        return w, b

    wm, bm = lin(ks[0], seq_dim, hidden_dim)      # seq_mlp.Linear
    wg, bg = lin(ks[1], node_feats, hidden_dim)   # gcn linear
    wf, bf = lin(ks[2], num_nodes, num_nodes)     # final fc
    emb_table = jax.random.normal(ks[3], (num_nodes, node_feats), jnp.float32)
    return wm, bm, wg, bg, wf, bf, emb_table


def make_adjacency(key, num_nodes):
    a = (jax.random.uniform(key, (num_nodes, num_nodes)) > 0.5).astype(jnp.float32)
    a = jnp.maximum(a, a.T)
    a = a + jnp.eye(num_nodes, dtype=jnp.float32)
    a = a / jnp.sum(a, axis=-1, keepdims=True)
    return a


if __name__ == "__main__":
    B, SEQ_DIM, NODE_FEATS, HIDDEN, NUM_NODES = 4, 64, 32, 32, 16

    key = jax.random.PRNGKey(0)
    k_emb, k_lab, k_adj, k_par = jax.random.split(key, 4)

    embeddings = jax.random.normal(k_emb, (B, SEQ_DIM), jnp.float32)
    # Labels supplied in a narrow dtype (bf16); upcast happens inside the kernel.
    labels = (jax.random.uniform(k_lab, (B, NUM_NODES)) > 0.5).astype(jnp.bfloat16)
    adj = make_adjacency(k_adj, NUM_NODES)

    wm, bm, wg, bg, wf, bf, emb_table = init_params(
        k_par, SEQ_DIM, NODE_FEATS, HIDDEN, NUM_NODES)

    # Embedder(nodesMat): trivial gather of the full table (glue JAX).
    nodes_mat = jnp.arange(NUM_NODES, dtype=jnp.int32)
    node_embd = jnp.take(emb_table, nodes_mat, axis=0)

    # One-time, batch-invariant precompute (Pallas kernel A).
    w_comb, b_comb = precompute_folded_weights(node_embd, adj, wg, bg, wf, bf, wm, bm)

    # Per-batch forward (Pallas kernel B): one GEMM + loss.
    loss, logits = protgcn_forward(embeddings, labels, w_comb, b_comb,
                                   num_labels=NUM_NODES)
    jax.block_until_ready((loss, logits))

    # Sanity check vs the un-folded pure-f32 reference of the module.  W_comb is
    # streamed in bf16 per the perf review, so tolerances are loosened accordingly.
    labels_f32 = labels.astype(jnp.float32)
    seq_out_ref = embeddings @ wm + bm
    graph_ref = jnp.maximum(adj @ (node_embd @ wg + bg), 0.0)
    logits_ref = (seq_out_ref @ graph_ref.T) @ wf + bf
    per = (jnp.maximum(logits_ref, 0.0) - logits_ref * labels_f32
           + jnp.log1p(jnp.exp(-jnp.abs(logits_ref))))
    loss_ref = jnp.mean(per)
    assert jnp.allclose(logits, logits_ref, atol=3e-2, rtol=3e-2), (
        float(jnp.max(jnp.abs(logits - logits_ref))))
    assert jnp.allclose(loss, loss_ref, atol=2e-2, rtol=2e-2), (
        float(loss), float(loss_ref))

    print("KERNEL_OK")
</pallas_src>

<mosaic_0001>
module attributes {stable_mosaic.version = 11 : i64} {
  func.func @_precompute_kernel(%arg0: memref<16x32xf32, #tpu.memory_space<vmem>>, %arg1: memref<16x16xf32, #tpu.memory_space<vmem>>, %arg2: memref<32x32xf32, #tpu.memory_space<vmem>>, %arg3: memref<1x32xf32, #tpu.memory_space<vmem>>, %arg4: memref<16x128xf32, #tpu.memory_space<vmem>>, %arg5: memref<1x128xf32, #tpu.memory_space<vmem>>, %arg6: memref<64x32xf32, #tpu.memory_space<vmem>>, %arg7: memref<1x32xf32, #tpu.memory_space<vmem>>, %arg8: memref<64x128xbf16, #tpu.memory_space<vmem>>, %arg9: memref<1x128xf32, #tpu.memory_space<vmem>>) attributes {dimension_semantics = [], scalar_prefetch = 0 : i64, scratch_operands = 0 : i64, tpu.core_type = #tpu.core_type<tc>} {
    %c0 = arith.constant 0 : index
    %c0_0 = arith.constant 0 : index
    %0 = vector.load %arg0[%c0, %c0_0] : memref<16x32xf32, #tpu.memory_space<vmem>>, vector<16x32xf32>
    %c0_1 = arith.constant 0 : index
    %c0_2 = arith.constant 0 : index
    %1 = vector.load %arg2[%c0_1, %c0_2] : memref<32x32xf32, #tpu.memory_space<vmem>>, vector<32x32xf32>
    %cst = arith.constant dense<0.000000e+00> : vector<16x32xf32>
    %2 = tpu.matmul %0, %1, %cst {dimension_numbers = #tpu.dot_dimension_numbers<[1], [0], [0], [1], [0, 0, 1, 1], [], []>} : vector<16x32xf32>, vector<32x32xf32>, vector<16x32xf32> -> vector<16x32xf32>
    %c0_3 = arith.constant 0 : index
    %c0_4 = arith.constant 0 : index
    %3 = vector.load %arg3[%c0_3, %c0_4] : memref<1x32xf32, #tpu.memory_space<vmem>>, vector<1x32xf32>
    %4 = vector.broadcast %3 : vector<1x32xf32> to vector<16x32xf32>
    %5 = arith.addf %2, %4 : vector<16x32xf32>
    %c0_5 = arith.constant 0 : index
    %c0_6 = arith.constant 0 : index
    %6 = vector.load %arg1[%c0_5, %c0_6] : memref<16x16xf32, #tpu.memory_space<vmem>>, vector<16x16xf32>
    %cst_7 = arith.constant dense<0.000000e+00> : vector<16x32xf32>
    %7 = tpu.matmul %6, %5, %cst_7 {dimension_numbers = #tpu.dot_dimension_numbers<[1], [0], [0], [1], [0, 0, 1, 1], [], []>} : vector<16x16xf32>, vector<16x32xf32>, vector<16x32xf32> -> vector<16x32xf32>
    %cst_8 = arith.constant 0.000000e+00 : f32
    %8 = vector.broadcast %cst_8 : f32 to vector<16x32xf32>
    %9 = arith.maximumf %7, %8 : vector<16x32xf32>
    %c0_9 = arith.constant 0 : index
    %c0_10 = arith.constant 0 : index
    %10 = vector.load %arg4[%c0_9, %c0_10] : memref<16x128xf32, #tpu.memory_space<vmem>>, vector<16x128xf32>
    %cst_11 = arith.constant dense<0.000000e+00> : vector<32x128xf32>
    %11 = tpu.matmul %9, %10, %cst_11 {dimension_numbers = #tpu.dot_dimension_numbers<[0], [0], [1], [1], [0, 1, 1, 1], [], []>} : vector<16x32xf32>, vector<16x128xf32>, vector<32x128xf32> -> vector<32x128xf32>
    %c0_12 = arith.constant 0 : index
    %c0_13 = arith.constant 0 : index
    %12 = vector.load %arg6[%c0_12, %c0_13] : memref<64x32xf32, #tpu.memory_space<vmem>>, vector<64x32xf32>
    %cst_14 = arith.constant dense<0.000000e+00> : vector<64x128xf32>
    %13 = tpu.matmul %12, %11, %cst_14 {dimension_numbers = #tpu.dot_dimension_numbers<[1], [0], [0], [1], [0, 0, 1, 1], [], []>} : vector<64x32xf32>, vector<32x128xf32>, vector<64x128xf32> -> vector<64x128xf32>
    %c0_15 = arith.constant 0 : index
    %c0_16 = arith.constant 0 : index
    %14 = vector.load %arg7[%c0_15, %c0_16] : memref<1x32xf32, #tpu.memory_space<vmem>>, vector<1x32xf32>
    %cst_17 = arith.constant dense<0.000000e+00> : vector<1x128xf32>
    %15 = tpu.matmul %14, %11, %cst_17 {dimension_numbers = #tpu.dot_dimension_numbers<[1], [0], [0], [1], [0, 0, 1, 1], [], []>} : vector<1x32xf32>, vector<32x128xf32>, vector<1x128xf32> -> vector<1x128xf32>
    %c0_18 = arith.constant 0 : index
    %c0_19 = arith.constant 0 : index
    %16 = vector.load %arg5[%c0_18, %c0_19] : memref<1x128xf32, #tpu.memory_space<vmem>>, vector<1x128xf32>
    %17 = arith.addf %15, %16 : vector<1x128xf32>
    %18 = arith.truncf %13 : vector<64x128xf32> to vector<64x128xbf16>
    %c0_20 = arith.constant 0 : index
    %c0_21 = arith.constant 0 : index
    %19 = vector.load %arg8[%c0_20, %c0_21] : memref<64x128xbf16, #tpu.memory_space<vmem>>, vector<64x128xbf16>
    tpu.vector_store %arg8[%c0_20, %c0_21], %18 {strides = array<i32>} : memref<64x128xbf16, #tpu.memory_space<vmem>>, vector<64x128xbf16>,
    %c0_22 = arith.constant 0 : index
    %c0_23 = arith.constant 0 : index
    %20 = vector.load %arg9[%c0_22, %c0_23] : memref<1x128xf32, #tpu.memory_space<vmem>>, vector<1x128xf32>
    tpu.vector_store %arg9[%c0_22, %c0_23], %17 {strides = array<i32>} : memref<1x128xf32, #tpu.memory_space<vmem>>, vector<1x128xf32>,
    return
  }
}

</mosaic_0001>

<llo_original>
// kernel: precompute_folded_weights.1
$region0: #{precompute_folded_weights.1}
  #allocation0 [shape = 'u32[]', space=smem, size = 0x4, offset = 0x4, fixed_abs, tag = 'smem constant byte address 0x4 - core index']
  #allocation1 [shape = 'u32[144,128]{1,0:T(1,128)}', space=vmem, size = 0x12000, scoped, tag = 'internal scratch']
  %s0 = inlined_call_operand.vmem [shape: f32[16,32], index: 0, kind: input, shape index: {}]
  %s1 = inlined_call_operand.vmem [shape: f32[16,16], index: 1, kind: input, shape index: {}]
  %s2 = inlined_call_operand.vmem [shape: f32[32,32], index: 2, kind: input, shape index: {}]
  %s3 = inlined_call_operand.vmem [shape: f32[1,32], index: 3, kind: input, shape index: {}]
  %s4 = inlined_call_operand.vmem [shape: f32[16,128], index: 4, kind: input, shape index: {}]
  %s5 = inlined_call_operand.vmem [shape: f32[1,128], index: 5, kind: input, shape index: {}]
  %s6 = inlined_call_operand.vmem [shape: f32[64,32], index: 6, kind: input, shape index: {}]
  %s7 = inlined_call_operand.vmem [shape: f32[1,32], index: 7, kind: input, shape index: {}]
  %s8 = inlined_call_operand.hbm [shape: bf16[64,128], index: 8, kind: output, shape index: {0}]
  %s9 = inlined_call_operand.hbm [shape: f32[1,128], index: 9, kind: output, shape index: {1}]
  %10 = xla_tuple %s8, %s9
  %s11 = sld [smem:[#allocation0]]
  $region50: #{precompute_folded_weights.1} parent=0
    _
  %s13 = ssub.s32 1, %s11
  %s14 = scalar_select 0, %s13, %s11
  $region1: #{precompute_folded_weights.1} parent=0
    #allocation2 [shape = 'u8[16384]{0}', space=vmem, size = 0x4000, scoped, tag = 'output window, operand 0, single buffered']
    #allocation3 [shape = 's32[1]{0}', space=sflag, size = 0x4, scoped, tag = 'scoped memory for precompute_folded_weights.1']
    #allocation4 [shape = 'u8[512]{0}', space=vmem, size = 0x400, scoped, tag = 'output window, operand 1, single buffered']
    #allocation5 [shape = 's32[1]{0}', space=sflag, size = 0x4, scoped, tag = 'scoped memory for precompute_folded_weights.1']
    %15 = vsyncpa [#allocation3], 0
    %16 = vsyncpa [#allocation5], 0
    // Predicated region
    $region2: #{precompute_folded_weights.1} parent=1 // pred_check
      _
    $region3: #{precompute_folded_weights.1} parent=1 // pred_check_branch
      %18 = sbr.rel (0) target = $region5
    $region4: #{precompute_folded_weights.1} parent=1 // pred_region
      _
    $region5: #{precompute_folded_weights.1} parent=1 // pred_fallthru
      _
    // Predicated region
    $region6: #{precompute_folded_weights.1} parent=1 // pred_check
      _
    $region7: #{precompute_folded_weights.1} parent=1 // pred_check_branch
      %20 = sbr.rel (0) target = $region9
    $region8: #{precompute_folded_weights.1} parent=1 // pred_region
      _
    $region9: #{precompute_folded_weights.1} parent=1 // pred_fallthru
      _
    // Predicated region
    $region10: #{precompute_folded_weights.1} parent=1 // pred_check
      _
    $region11: #{precompute_folded_weights.1} parent=1 // pred_check_branch
      %22 = sbr.rel (0) target = $region13
    $region12: #{precompute_folded_weights.1} parent=1 // pred_region
      _
    $region13: #{precompute_folded_weights.1} parent=1 // pred_fallthru
      _
    // Predicated region
    $region14: #{precompute_folded_weights.1} parent=1 // pred_check
      _
    $region15: #{precompute_folded_weights.1} parent=1 // pred_check_branch
      %24 = sbr.rel (0) target = $region17
    $region16: #{precompute_folded_weights.1} parent=1 // pred_region
      _
    $region17: #{precompute_folded_weights.1} parent=1 // pred_fallthru
      _
    // Predicated region
    $region18: #{precompute_folded_weights.1} parent=1 // pred_check
      _
    $region19: #{precompute_folded_weights.1} parent=1 // pred_check_branch
      %26 = sbr.rel (0) target = $region21
    $region20: #{precompute_folded_weights.1} parent=1 // pred_region
      _
    $region21: #{precompute_folded_weights.1} parent=1 // pred_fallthru
      _
    // Predicated region
    $region22: #{precompute_folded_weights.1} parent=1 // pred_check
      _
    $region23: #{precompute_folded_weights.1} parent=1 // pred_check_branch
      %28 = sbr.rel (0) target = $region25
    $region24: #{precompute_folded_weights.1} parent=1 // pred_region
      _
    $region25: #{precompute_folded_weights.1} parent=1 // pred_fallthru
      _
    // Predicated region
    $region26: #{precompute_folded_weights.1} parent=1 // pred_check
      _
    $region27: #{precompute_folded_weights.1} parent=1 // pred_check_branch
      %30 = sbr.rel (0) target = $region29
    $region28: #{precompute_folded_weights.1} parent=1 // pred_region
      _
    $region29: #{precompute_folded_weights.1} parent=1 // pred_fallthru
      _
    // Predicated region
    $region30: #{precompute_folded_weights.1} parent=1 // pred_check
      _
    $region31: #{precompute_folded_weights.1} parent=1 // pred_check_branch
      %32 = sbr.rel (0) target = $region33
    $region32: #{precompute_folded_weights.1} parent=1 // pred_region
      _
    $region33: #{precompute_folded_weights.1} parent=1 // pred_fallthru
      _
    %v33 = vld [vmem:[%s0] sm:$0xff]
    %v34 = vld [vmem:[%s0 + $0x8] sm:$0xff]
    %v35 = vld [vmem:[%s2] sm:$0xff]
    %v36 = vld [vmem:[%s2 + $0x8] sm:$0xff]
    %v37 = vld [vmem:[%s2 + $0x10] sm:$0xff]
    %v38 = vld [vmem:[%s2 + $0x18] sm:$0xff]
    %v39 = vld [vmem:[%s3] sm:$0x1]
    %v41 = vlaneseq
    %v42 = vshrl.u32 %v41, 7
    %v43 = vsub.s32 0, %v42
    %v44 = vrot.slane %v39, %v43
    %vm46 = vcmask 261120
    %v48 = vsel %vm46, %v33, 0
    %v51 = vsel %vm46, %v34, 0
    %53 = vmatprep.subr.mxu0 0.0
    %54 = vmatpush1.msra.mxu0 %v35
    %55 = vmatprep.subr.mxu0 0.0
    %56 = vmatpush1.msra.mxu0 %v36
    %57 = vmatprep.subr.mxu0 0.0
    %58 = vmatpush1.msra.mxu0 %v37
    %59 = vmatprep.subr.mxu0 0.0
    %60 = vmatpush1.msra.mxu0 %v38
    %61 = vmatprep.subr.mxu0 0.0
    %62 = vmatpush1.msra.mxu0 0.0
    %63 = vmatprep.subr.mxu0 0.0
    %64 = vmatpush1.msra.mxu0 0.0
    %65 = vmatprep.subr.mxu0 0.0
    %66 = vmatpush1.msra.mxu0 0.0
    %67 = vmatprep.subr.mxu0 0.0
    %68 = vmatpush1.msra.mxu0 0.0
    %69 = vmatprep.subr.mxu0 0.0
    %70 = vmatpush1.msra.mxu0 0.0
    %71 = vmatprep.subr.mxu0 0.0
    %72 = vmatpush1.msra.mxu0 0.0
    %73 = vmatprep.subr.mxu0 0.0
    %74 = vmatpush1.msra.mxu0 0.0
    %75 = vmatprep.subr.mxu0 0.0
    %76 = vmatpush1.msra.mxu0 0.0
    %77 = vmatprep.subr.mxu0 0.0
    %78 = vmatpush1.msra.mxu0 0.0
    %79 = vmatprep.subr.mxu0 0.0
    %80 = vmatpush1.msra.mxu0 0.0
    %81 = vmatprep.subr.mxu0 0.0
    %82 = vmatpush1.msra.mxu0 0.0
    %83 = vmatprep.subr.mxu0 0.0
    %84 = vmatpush1.msra.mxu0 0.0
    %85 = vmatprep.subr.mxu0 0.0
    %86 = vmatpush1.msra.mxu0 0.0
    %87 = vmatprep.subr.mxu0 0.0
    %88 = vmatpush1.msra.mxu0 0.0
    %89 = vmatprep.subr.mxu0 0.0
    %90 = vmatpush1.msra.mxu0 0.0
    %91 = vmatprep.subr.mxu0 0.0
    %92 = vmatpush1.msra.mxu0 0.0
    %93 = vmatprep.subr.mxu0 0.0
    %94 = vmatpush1.msra.mxu0 0.0
    %95 = vmatprep.subr.mxu0 0.0
    %96 = vmatpush1.msra.mxu0 0.0
    %97 = vmatprep.subr.mxu0 0.0
    %98 = vmatpush1.msra.mxu0 0.0
    %99 = vmatprep.subr.mxu0 0.0
    %100 = vmatpush1.msra.mxu0 0.0
    %101 = vmatprep.subr.mxu0 0.0
    %102 = vmatpush1.msra.mxu0 0.0
    %103 = vmatprep.subr.mxu0 0.0
    %104 = vmatpush1.msra.mxu0 0.0
    %105 = vmatprep.subr.mxu0 0.0
    %106 = vmatpush1.msra.mxu0 0.0
    %107 = vmatprep.subr.mxu0 0.0
    %108 = vmatpush1.msra.mxu0 0.0
    %109 = vmatprep.subr.mxu0 0.0
    %110 = vmatpush1.msra.mxu0 0.0
    %111 = vmatprep.subr.mxu0 0.0
    %112 = vmatpush1.msra.mxu0 0.0
    %113 = vmatprep.subr.mxu0 0.0
    %114 = vmatpush1.msra.mxu0 0.0
    %115 = vmatprep.subr.mxu0 0.0
    %116 = vmatpush1.msra.mxu0 0.0
    %117 = vmatprep.mubr.f32.mxu0 0.0
    %118 = vmatmul.mubr.f32.gmra.mrb[0].mxu0 %v48
    %v119 = vpop.f32.mrb[0].mxu0
    %v120 = vadd.f32 %v44, %v119
    %v121 = vpop.f32.mrb[0].mxu0
    %122 = vmatprep.mubr.f32.mxu0 0.0
    %123 = vmatmul.mubr.f32.gmra.mrb[0].mxu0 %v51
    %v124 = vpop.f32.mrb[0].mxu0
    %v125 = vadd.f32 %v44, %v124
    %v126 = vpop.f32.mrb[0].mxu0
    %127 = vdwg.mxu0
    %v128 = vld [vmem:[%s1] sm:$0xff]
    %v129 = vld [vmem:[%s1 + $0x8] sm:$0xff]
    %vm130 = vcmask 130048
    %v132 = vsel %vm130, %v128, 0
    %v135 = vsel %vm130, %v129, 0
    %137 = vmatprep.subr.mxu0 0.0
    %138 = vmatpush1.msra.mxu0 %v120
    %139 = vmatprep.subr.mxu0 0.0
    %140 = vmatpush1.msra.mxu0 %v125
    %141 = vmatprep.subr.mxu0 0.0
    %142 = vmatpush1.msra.mxu0 0.0
    %143 = vmatprep.subr.mxu0 0.0
    %144 = vmatpush1.msra.mxu0 0.0
    %145 = vmatprep.subr.mxu0 0.0
    %146 = vmatpush1.msra.mxu0 0.0
    %147 = vmatprep.subr.mxu0 0.0
    %148 = vmatpush1.msra.mxu0 0.0
    %149 = vmatprep.subr.mxu0 0.0
    %150 = vmatpush1.msra.mxu0 0.0
    %151 = vmatprep.subr.mxu0 0.0
    %152 = vmatpush1.msra.mxu0 0.0
    %153 = vmatprep.subr.mxu0 0.0
    %154 = vmatpush1.msra.mxu0 0.0
    %155 = vmatprep.subr.mxu0 0.0
    %156 = vmatpush1.msra.mxu0 0.0
    %157 = vmatprep.subr.mxu0 0.0
    %158 = vmatpush1.msra.mxu0 0.0
    %159 = vmatprep.subr.mxu0 0.0
    %160 = vmatpush1.msra.mxu0 0.0
    %161 = vmatprep.subr.mxu0 0.0
    %162 = vmatpush1.msra.mxu0 0.0
    %163 = vmatprep.subr.mxu0 0.0
    %164 = vmatpush1.msra.mxu0 0.0
    %165 = vmatprep.subr.mxu0 0.0
    %166 = vmatpush1.msra.mxu0 0.0
    %167 = vmatprep.subr.mxu0 0.0
    %168 = vmatpush1.msra.mxu0 0.0
    %169 = vmatprep.subr.mxu0 0.0
    %170 = vmatpush1.msra.mxu0 0.0
    %171 = vmatprep.subr.mxu0 0.0
    %172 = vmatpush1.msra.mxu0 0.0
    %173 = vmatprep.subr.mxu0 0.0
    %174 = vmatpush1.msra.mxu0 0.0
    %175 = vmatprep.subr.mxu0 0.0
    %176 = vmatpush1.msra.mxu0 0.0
    %177 = vmatprep.subr.mxu0 0.0
    %178 = vmatpush1.msra.mxu0 0.0
    %179 = vmatprep.subr.mxu0 0.0
    %180 = vmatpush1.msra.mxu0 0.0
    %181 = vmatprep.subr.mxu0 0.0
    %182 = vmatpush1.msra.mxu0 0.0
    %183 = vmatprep.subr.mxu0 0.0
    %184 = vmatpush1.msra.mxu0 0.0
    %185 = vmatprep.subr.mxu0 0.0
    %186 = vmatpush1.msra.mxu0 0.0
    %187 = vmatprep.subr.mxu0 0.0
    %188 = vmatpush1.msra.mxu0 0.0
    %189 = vmatprep.subr.mxu0 0.0
    %190 = vmatpush1.msra.mxu0 0.0
    %191 = vmatprep.subr.mxu0 0.0
    %192 = vmatpush1.msra.mxu0 0.0
    %193 = vmatprep.subr.mxu0 0.0
    %194 = vmatpush1.msra.mxu0 0.0
    %195 = vmatprep.subr.mxu0 0.0
    %196 = vmatpush1.msra.mxu0 0.0
    %197 = vmatprep.subr.mxu0 0.0
    %198 = vmatpush1.msra.mxu0 0.0
    %199 = vmatprep.subr.mxu0 0.0
    %200 = vmatpush1.msra.mxu0 0.0
    %201 = vmatprep.mubr.f32.mxu0 0.0
    %202 = vmatmul.mubr.f32.gmra.mrb[0].mxu0 %v132
    %v203 = vpop.f32.mrb[0].mxu0
    %v204 = vadd.f32 0.0, %v203
    %v205 = vpop.f32.mrb[0].mxu0
    %206 = vmatprep.mubr.f32.mxu0 0.0
    %207 = vmatmul.mubr.f32.gmra.mrb[0].mxu0 %v135
    %v208 = vpop.f32.mrb[0].mxu0
    %v209 = vadd.f32 0.0, %v208
    %v210 = vpop.f32.mrb[0].mxu0
    %211 = vdwg.mxu0
    %v212 = vmax.f32 %v204, 0.0
    %v213 = vmax.f32 %v209, 0.0
    %v214 = vld [vmem:[%s4] sm:$0xff]
    %v215 = vld [vmem:[%s4 + $0x8] sm:$0xff]
    %216 = vxpose.xlu0.b32.start [1/16] %v212, 128
    %217 = vxpose.xlu0.b32.cont [2/16] %v213, 128
    %218 = vxpose.xlu0.b32.cont [3/16] 0.0, 128
    %219 = vxpose.xlu0.b32.cont [4/16] 0.0, 128
    %220 = vxpose.xlu0.b32.cont [5/16] 0.0, 128
    %221 = vxpose.xlu0.b32.cont [6/16] 0.0, 128
    %222 = vxpose.xlu0.b32.cont [7/16] 0.0, 128
    %223 = vxpose.xlu0.b32.cont [8/16] 0.0, 128
    %224 = vxpose.xlu0.b32.cont [9/16] 0.0, 128
    %225 = vxpose.xlu0.b32.cont [10/16] 0.0, 128
    %226 = vxpose.xlu0.b32.cont [11/16] 0.0, 128
    %227 = vxpose.xlu0.b32.cont [12/16] 0.0, 128
    %228 = vxpose.xlu0.b32.cont [13/16] 0.0, 128
    %229 = vxpose.xlu0.b32.cont [14/16] 0.0, 128
    %230 = vxpose.xlu0.b32.cont [15/16] 0.0, 128
    %231 = vxpose.xlu0.b32.end [16/16] 0.0, 128
    %v232 = vpop.trf.xlu0
    %v233 = vpop.trf.xlu0
    %v234 = vpop.trf.xlu0
    %v235 = vpop.trf.xlu0
    %v236 = vpop.trf.xlu0
    %v237 = vpop.trf.xlu0
    %v238 = vpop.trf.xlu0
    %v239 = vpop.trf.xlu0
    %v240 = vpop.trf.xlu0
    %v241 = vpop.trf.xlu0
    %v242 = vpop.trf.xlu0
    %v243 = vpop.trf.xlu0
    %v244 = vpop.trf.xlu0
    %v245 = vpop.trf.xlu0
    %v246 = vpop.trf.xlu0
    %v247 = vpop.trf.xlu0
    %v249 = vsel %vm130, %v232, 0
    %v252 = vsel %vm130, %v233, 0
    %v255 = vsel %vm130, %v234, 0
    %v258 = vsel %vm130, %v235, 0
    %260 = vmatprep.subr.mxu0 0.0
    %261 = vmatpush1.msra.mxu0 %v214
    %262 = vmatprep.subr.mxu0 0.0
    %263 = vmatpush1.msra.mxu0 %v215
    %264 = vmatprep.subr.mxu0 0.0
    %265 = vmatpush1.msra.mxu0 0.0
    %266 = vmatprep.subr.mxu0 0.0
    %267 = vmatpush1.msra.mxu0 0.0
    %268 = vmatprep.subr.mxu0 0.0
    %269 = vmatpush1.msra.mxu0 0.0
    %270 = vmatprep.subr.mxu0 0.0
    %271 = vmatpush1.msra.mxu0 0.0
    %272 = vmatprep.subr.mxu0 0.0
    %273 = vmatpush1.msra.mxu0 0.0
    %274 = vmatprep.subr.mxu0 0.0
    %275 = vmatpush1.msra.mxu0 0.0
    %276 = vmatprep.subr.mxu0 0.0
    %277 = vmatpush1.msra.mxu0 0.0
    %278 = vmatprep.subr.mxu0 0.0
    %279 = vmatpush1.msra.mxu0 0.0
    %280 = vmatprep.subr.mxu0 0.0
    %281 = vmatpush1.msra.mxu0 0.0
    %282 = vmatprep.subr.mxu0 0.0
    %283 = vmatpush1.msra.mxu0 0.0
    %284 = vmatprep.subr.mxu0 0.0
    %285 = vmatpush1.msra.mxu0 0.0
    %286 = vmatprep.subr.mxu0 0.0
    %287 = vmatpush1.msra.mxu0 0.0
    %288 = vmatprep.subr.mxu0 0.0
    %289 = vmatpush1.msra.mxu0 0.0
    %290 = vmatprep.subr.mxu0 0.0
    %291 = vmatpush1.msra.mxu0 0.0
    %292 = vmatprep.subr.mxu0 0.0
    %293 = vmatpush1.msra.mxu0 0.0
    %294 = vmatprep.subr.mxu0 0.0
    %295 = vmatpush1.msra.mxu0 0.0
    %296 = vmatprep.subr.mxu0 0.0
    %297 = vmatpush1.msra.mxu0 0.0
    %298 = vmatprep.subr.mxu0 0.0
    %299 = vmatpush1.msra.mxu0 0.0
    %300 = vmatprep.subr.mxu0 0.0
    %301 = vmatpush1.msra.mxu0 0.0
    %302 = vmatprep.subr.mxu0 0.0
    %303 = vmatpush1.msra.mxu0 0.0
    %304 = vmatprep.subr.mxu0 0.0
    %305 = vmatpush1.msra.mxu0 0.0
    %306 = vmatprep.subr.mxu0 0.0
    %307 = vmatpush1.msra.mxu0 0.0
    %308 = vmatprep.subr.mxu0 0.0
    %309 = vmatpush1.msra.mxu0 0.0
    %310 = vmatprep.subr.mxu0 0.0
    %311 = vmatpush1.msra.mxu0 0.0
    %312 = vmatprep.subr.mxu0 0.0
    %313 = vmatpush1.msra.mxu0 0.0
    %314 = vmatprep.subr.mxu0 0.0
    %315 = vmatpush1.msra.mxu0 0.0
    %316 = vmatprep.subr.mxu0 0.0
    %317 = vmatpush1.msra.mxu0 0.0
    %318 = vmatprep.subr.mxu0 0.0
    %319 = vmatpush1.msra.mxu0 0.0
    %320 = vmatprep.subr.mxu0 0.0
    %321 = vmatpush1.msra.mxu0 0.0
    %322 = vmatprep.subr.mxu0 0.0
    %323 = vmatpush1.msra.mxu0 0.0
    %324 = vmatprep.mubr.f32.mxu0 0.0
    %325 = vmatmul.mubr.f32.gmra.mrb[0].mxu0 %v249
    %v326 = vpop.f32.mrb[0].mxu0
    %v327 = vadd.f32 0.0, %v326
    %v328 = vpop.f32.mrb[0].mxu0
    %329 = vmatprep.mubr.f32.mxu0 0.0
    %330 = vmatmul.mubr.f32.gmra.mrb[0].mxu0 %v252
    %v331 = vpop.f32.mrb[0].mxu0
    %v332 = vadd.f32 0.0, %v331
    %v333 = vpop.f32.mrb[0].mxu0
    %334 = vmatprep.mubr.f32.mxu0 0.0
    %335 = vmatmul.mubr.f32.gmra.mrb[0].mxu0 %v255
    %v336 = vpop.f32.mrb[0].mxu0
    %v337 = vadd.f32 0.0, %v336
    %v338 = vpop.f32.mrb[0].mxu0
    %339 = vmatprep.mubr.f32.mxu0 0.0
    %340 = vmatmul.mubr.f32.gmra.mrb[0].mxu0 %v258
    %v341 = vpop.f32.mrb[0].mxu0
    %v342 = vadd.f32 0.0, %v341
    %v343 = vpop.f32.mrb[0].mxu0
    %344 = vdwg.mxu0
    %v345 = vld [vmem:[%s6] sm:$0xff]
    %v346 = vld [vmem:[%s6 + $0x8] sm:$0xff]
    %v347 = vld [vmem:[%s6 + $0x10] sm:$0xff]
    %v348 = vld [vmem:[%s6 + $0x18] sm:$0xff]
    %v349 = vld [vmem:[%s6 + $0x20] sm:$0xff]
    %v350 = vld [vmem:[%s6 + $0x28] sm:$0xff]
    %v351 = vld [vmem:[%s6 + $0x30] sm:$0xff]
    %v352 = vld [vmem:[%s6 + $0x38] sm:$0xff]
    %v354 = vsel %vm46, %v345, 0
    %v357 = vsel %vm46, %v346, 0
    %v360 = vsel %vm46, %v347, 0
    %v363 = vsel %vm46, %v348, 0
    %v366 = vsel %vm46, %v349, 0
    %v369 = vsel %vm46, %v350, 0
    %v372 = vsel %vm46, %v351, 0
    %v375 = vsel %vm46, %v352, 0
    %377 = vmatprep.subr.mxu0 0.0
    %378 = vmatpush1.msra.mxu0 %v327
    %379 = vmatprep.subr.mxu0 0.0
    %380 = vmatpush1.msra.mxu0 %v332
    %381 = vmatprep.subr.mxu0 0.0
    %382 = vmatpush1.msra.mxu0 %v337
    %383 = vmatprep.subr.mxu0 0.0
    %384 = vmatpush1.msra.mxu0 %v342
    %385 = vmatprep.subr.mxu0 0.0
    %386 = vmatpush1.msra.mxu0 0.0
    %387 = vmatprep.subr.mxu0 0.0
    %388 = vmatpush1.msra.mxu0 0.0
    %389 = vmatprep.subr.mxu0 0.0
    %390 = vmatpush1.msra.mxu0 0.0
    %391 = vmatprep.subr.mxu0 0.0
    %392 = vmatpush1.msra.mxu0 0.0
    %393 = vmatprep.subr.mxu0 0.0
    %394 = vmatpush1.msra.mxu0 0.0
    %395 = vmatprep.subr.mxu0 0.0
    %396 = vmatpush1.msra.mxu0 0.0
    %397 = vmatprep.subr.mxu0 0.0
    %398 = vmatpush1.msra.mxu0 0.0
    %399 = vmatprep.subr.mxu0 0.0
    %400 = vmatpush1.msra.mxu0 0.0
    %401 = vmatprep.subr.mxu0 0.0
    %402 = vmatpush1.msra.mxu0 0.0
    %403 = vmatprep.subr.mxu0 0.0
    %404 = vmatpush1.msra.mxu0 0.0
    %405 = vmatprep.subr.mxu0 0.0
    %406 = vmatpush1.msra.mxu0 0.0
    %407 = vmatprep.subr.mxu0 0.0
    %408 = vmatpush1.msra.mxu0 0.0
    %409 = vmatprep.subr.mxu0 0.0
    %410 = vmatpush1.msra.mxu0 0.0
    %411 = vmatprep.subr.mxu0 0.0
    %412 = vmatpush1.msra.mxu0 0.0
    %413 = vmatprep.subr.mxu0 0.0
    %414 = vmatpush1.msra.mxu0 0.0
    %415 = vmatprep.subr.mxu0 0.0
    %416 = vmatpush1.msra.mxu0 0.0
    %417 = vmatprep.subr.mxu0 0.0
    %418 = vmatpush1.msra.mxu0 0.0
    %419 = vmatprep.subr.mxu0 0.0
    %420 = vmatpush1.msra.mxu0 0.0
    %421 = vmatprep.subr.mxu0 0.0
    %422 = vmatpush1.msra.mxu0 0.0
    %423 = vmatprep.subr.mxu0 0.0
    %424 = vmatpush1.msra.mxu0 0.0
    %425 = vmatprep.subr.mxu0 0.0
    %426 = vmatpush1.msra.mxu0 0.0
    %427 = vmatprep.subr.mxu0 0.0
    %428 = vmatpush1.msra.mxu0 0.0
    %429 = vmatprep.subr.mxu0 0.0
    %430 = vmatpush1.msra.mxu0 0.0
    %431 = vmatprep.subr.mxu0 0.0
    %432 = vmatpush1.msra.mxu0 0.0
    %433 = vmatprep.subr.mxu0 0.0
    %434 = vmatpush1.msra.mxu0 0.0
    %435 = vmatprep.subr.mxu0 0.0
    %436 = vmatpush1.msra.mxu0 0.0
    %437 = vmatprep.subr.mxu0 0.0
    %438 = vmatpush1.msra.mxu0 0.0
    %439 = vmatprep.subr.mxu0 0.0
    %440 = vmatpush1.msra.mxu0 0.0
    %441 = vmatprep.mubr.f32.mxu0 0.0
    %442 = vmatmul.mubr.f32.gmra.mrb[0].mxu0 %v354
    %v443 = vpop.f32.mrb[0].mxu0
    %v444 = vadd.f32 0.0, %v443
    %v445 = vpop.f32.mrb[0].mxu0
    %446 = vmatprep.mubr.f32.mxu0 0.0
    %447 = vmatmul.mubr.f32.gmra.mrb[0].mxu0 %v357
    %v448 = vpop.f32.mrb[0].mxu0
    %v449 = vadd.f32 0.0, %v448
    %v450 = vpop.f32.mrb[0].mxu0
    %451 = vmatprep.mubr.f32.mxu0 0.0
    %452 = vmatmul.mubr.f32.gmra.mrb[0].mxu0 %v360
    %v453 = vpop.f32.mrb[0].mxu0
    %v454 = vadd.f32 0.0, %v453
    %v455 = vpop.f32.mrb[0].mxu0
    %456 = vmatprep.mubr.f32.mxu0 0.0
    %457 = vmatmul.mubr.f32.gmra.mrb[0].mxu0 %v363
    %v458 = vpop.f32.mrb[0].mxu0
    %v459 = vadd.f32 0.0, %v458
    %v460 = vpop.f32.mrb[0].mxu0
    %461 = vmatprep.mubr.f32.mxu0 0.0
    %462 = vmatmul.mubr.f32.gmra.mrb[0].mxu0 %v366
    %v463 = vpop.f32.mrb[0].mxu0
    %v464 = vadd.f32 0.0, %v463
    %v465 = vpop.f32.mrb[0].mxu0
    %466 = vmatprep.mubr.f32.mxu0 0.0
    %467 = vmatmul.mubr.f32.gmra.mrb[0].mxu0 %v369
    %v468 = vpop.f32.mrb[0].mxu0
    %v469 = vadd.f32 0.0, %v468
    %v470 = vpop.f32.mrb[0].mxu0
    %471 = vmatprep.mubr.f32.mxu0 0.0
    %472 = vmatmul.mubr.f32.gmra.mrb[0].mxu0 %v372
    %v473 = vpop.f32.mrb[0].mxu0
    %v474 = vadd.f32 0.0, %v473
    %v475 = vpop.f32.mrb[0].mxu0
    %476 = vmatprep.mubr.f32.mxu0 0.0
    %477 = vmatmul.mubr.f32.gmra.mrb[0].mxu0 %v375
    %v478 = vpop.f32.mrb[0].mxu0
    %v479 = vadd.f32 0.0, %v478
    %v480 = vpop.f32.mrb[0].mxu0
    %481 = vdwg.mxu0
    %v482 = vld [vmem:[%s7] sm:$0x1]
    %v483 = vld [vmem:[%s5] sm:$0x1]
    %v485 = vsel %vm46, %v482, 0
    %487 = vmatprep.subr.mxu0 0.0
    %488 = vmatpush1.msra.mxu0 %v327
    %489 = vmatprep.subr.mxu0 0.0
    %490 = vmatpush1.msra.mxu0 %v332
    %491 = vmatprep.subr.mxu0 0.0
    %492 = vmatpush1.msra.mxu0 %v337
    %493 = vmatprep.subr.mxu0 0.0
    %494 = vmatpush1.msra.mxu0 %v342
    %495 = vmatprep.subr.mxu0 0.0
    %496 = vmatpush1.msra.mxu0 0.0
    %497 = vmatprep.subr.mxu0 0.0
    %498 = vmatpush1.msra.mxu0 0.0
    %499 = vmatprep.subr.mxu0 0.0
    %500 = vmatpush1.msra.mxu0 0.0
    %501 = vmatprep.subr.mxu0 0.0
    %502 = vmatpush1.msra.mxu0 0.0
    %503 = vmatprep.subr.mxu0 0.0
    %504 = vmatpush1.msra.mxu0 0.0
    %505 = vmatprep.subr.mxu0 0.0
    %506 = vmatpush1.msra.mxu0 0.0
    %507 = vmatprep.subr.mxu0 0.0
    %508 = vmatpush1.msra.mxu0 0.0
    %509 = vmatprep.subr.mxu0 0.0
    %510 = vmatpush1.msra.mxu0 0.0
    %511 = vmatprep.subr.mxu0 0.0
    %512 = vmatpush1.msra.mxu0 0.0
    %513 = vmatprep.subr.mxu0 0.0
    %514 = vmatpush1.msra.mxu0 0.0
    %515 = vmatprep.subr.mxu0 0.0
    %516 = vmatpush1.msra.mxu0 0.0
    %517 = vmatprep.subr.mxu0 0.0
    %518 = vmatpush1.msra.mxu0 0.0
    %519 = vmatprep.subr.mxu0 0.0
    %520 = vmatpush1.msra.mxu0 0.0
    %521 = vmatprep.subr.mxu0 0.0
    %522 = vmatpush1.msra.mxu0 0.0
    %523 = vmatprep.subr.mxu0 0.0
    %524 = vmatpush1.msra.mxu0 0.0
    %525 = vmatprep.subr.mxu0 0.0
    %526 = vmatpush1.msra.mxu0 0.0
    %527 = vmatprep.subr.mxu0 0.0
    %528 = vmatpush1.msra.mxu0 0.0
    %529 = vmatprep.subr.mxu0 0.0
    %530 = vmatpush1.msra.mxu0 0.0
    %531 = vmatprep.subr.mxu0 0.0
    %532 = vmatpush1.msra.mxu0 0.0
    %533 = vmatprep.subr.mxu0 0.0
    %534 = vmatpush1.msra.mxu0 0.0
    %535 = vmatprep.subr.mxu0 0.0
    %536 = vmatpush1.msra.mxu0 0.0
    %537 = vmatprep.subr.mxu0 0.0
    %538 = vmatpush1.msra.mxu0 0.0
    %539 = vmatprep.subr.mxu0 0.0
    %540 = vmatpush1.msra.mxu0 0.0
    %541 = vmatprep.subr.mxu0 0.0
    %542 = vmatpush1.msra.mxu0 0.0
    %543 = vmatprep.subr.mxu0 0.0
    %544 = vmatpush1.msra.mxu0 0.0
    %545 = vmatprep.subr.mxu0 0.0
    %546 = vmatpush1.msra.mxu0 0.0
    %547 = vmatprep.subr.mxu0 0.0
    %548 = vmatpush1.msra.mxu0 0.0
    %549 = vmatprep.subr.mxu0 0.0
    %550 = vmatpush1.msra.mxu0 0.0
    %551 = vmatprep.mubr.f32.mxu0 0.0
    %552 = vmatmul.mubr.f32.gmra.mrb[0].mxu0 %v485
    %v553 = vpop.f32.mrb[0].mxu0
    %v554 = vadd.f32 %v483, %v553
    %v555 = vpop.f32.mrb[0].mxu0
    %556 = vdwg.mxu0
    %v557 = vpack.c.bf16 %v449, %v444
    %v558 = vpack.c.bf16 %v459, %v454
    %v559 = vpack.c.bf16 %v469, %v464
    %v560 = vpack.c.bf16 %v479, %v474
    %v565 = vunpack.c.l.b16 %v557
    %v566 = vunpack.c.h.b16 %v557
    %v567 = vunpack.c.l.b16 %v558
    %v568 = vunpack.c.h.b16 %v558
    %v569 = vunpack.c.l.b16 %v559
    %v570 = vunpack.c.h.b16 %v559
    %v571 = vunpack.c.l.b16 %v560
    %v572 = vunpack.c.h.b16 %v560
    %v573 = vpack.c.b16 %v565, %v565
    %v574 = vpack.c.b16 %v566, %v566
    %v575 = vpack.c.b16 %v567, %v567
    %v576 = vpack.c.b16 %v568, %v568
    %v577 = vpack.c.b16 %v569, %v569
    %v578 = vpack.c.b16 %v570, %v570
    %v579 = vpack.c.b16 %v571, %v571
    %v580 = vpack.c.b16 %v572, %v572
    %589 = vst [vmem:[#allocation2] sm:$0xf] %v573
    %590 = vst [vmem:[#allocation2 + $0x4] sm:$0xf] %v574
    %591 = vst [vmem:[#allocation2 + $0x8] sm:$0xf] %v575
    %592 = vst [vmem:[#allocation2 + $0xc] sm:$0xf] %v576
    %593 = vst [vmem:[#allocation2 + $0x10] sm:$0xf] %v577
    %594 = vst [vmem:[#allocation2 + $0x14] sm:$0xf] %v578
    %595 = vst [vmem:[#allocation2 + $0x18] sm:$0xf] %v579
    %596 = vst [vmem:[#allocation2 + $0x1c] sm:$0xf] %v580
    %597 = vst [vmem:[#allocation4] sm:$0x1] %v554
    // Predicated region
    $region34: #{precompute_folded_weights.1} parent=1 // pred_check
      _
    $region35: #{precompute_folded_weights.1} parent=1 // pred_check_branch
      %599 = sbr.rel (0) target = $region37
    $region36: #{precompute_folded_weights.1} parent=1 // pred_region
      %s601 = ssub.s32 512, 512
      %602 = vsyncadd [#allocation3], %s601
      %s603 = sshll.u32 [#allocation2], 4
      %s604 = int_to_ptr.vmem [resolvable:$true] %s603
      %609 = dma.vmem_to_hbm [thread:$0]  %s604, 512, %s8, [#allocation3], 64, 64, 4
    $region37: #{precompute_folded_weights.1} parent=1 // pred_fallthru
      _
    // Predicated region
    $region38: #{precompute_folded_weights.1} parent=1 // pred_check
      _
    $region39: #{precompute_folded_weights.1} parent=1 // pred_check_branch
      %611 = sbr.rel (0) target = $region41
    $region40: #{precompute_folded_weights.1} parent=1 // pred_region
      %s613 = ssub.s32 16, 16
      %614 = vsyncadd [#allocation5], %s613
      %s616 = sshll.u32 [#allocation4], 4
      %s617 = int_to_ptr.vmem [resolvable:$true] %s616
      %619 = dma.vmem_to_hbm [thread:$0]  %s617, 16, %s9, [#allocation5]
    $region41: #{precompute_folded_weights.1} parent=1 // pred_fallthru
      _
    // Predicated region
    $region42: #{precompute_folded_weights.1} parent=1 // pred_check
      _
    $region43: #{precompute_folded_weights.1} parent=1 // pred_check_branch
      %621 = sbr.rel (0) target = $region45
    $region44: #{precompute_folded_weights.1} parent=1 // pred_region
      %622 = dma.done [#allocation3], 512
    $region45: #{precompute_folded_weights.1} parent=1 // pred_fallthru
      _
    // Predicated region
    $region46: #{precompute_folded_weights.1} parent=1 // pred_check
      _
    $region47: #{precompute_folded_weights.1} parent=1 // pred_check_branch
      %624 = sbr.rel (0) target = $region49
    $region48: #{precompute_folded_weights.1} parent=1 // pred_region
      %625 = dma.done [#allocation5], 16
    $region49: #{precompute_folded_weights.1} parent=1 // pred_fallthru
      _
    %626 = vsyncpa [#allocation3], 1
    %627 = vsyncpa [#allocation5], 1

</llo_original>
